<compile_context>
chip_gen: v5e
topology: v5e:2x2
jax: 0.10.0
libtpu: 0.0.40
codegen_flags: <defaults>
</compile_context>

<pallas_src>
from functools import partial

import jax
import jax.numpy as jnp
from jax.experimental import pallas as pl
from jax.experimental.pallas import tpu as pltpu

LANE = 128  # TPU lane width: all feature dims are padded to a multiple of this.


def _round_up(n, m):
    return ((n + m - 1) // m) * m


# ----------------------------------------------------------------------------
# Fused kernel: G-space backward projection + MLP forward, all on the MXU
# ----------------------------------------------------------------------------
def _gmodel_fused_kernel(g_ref,      # SMEM (1, G+1) f32, g_ref[0, 0] == 1.0
                         x_ref,      # VMEM (TB, DI_P) f32; col d_in carries 1.0
                         w1_ref,     # VMEM ((G+1)*DI_P, H_P)  param dtype
                         w2_ref,     # VMEM ((G+1)*H_P, DO_P)  param dtype
                         out_ref):   # VMEM (TB, DO_P) f32
    g1 = g_ref.shape[1]              # G + 1 (static)
    w_dtype = w1_ref.dtype

    x = x_ref[...]
    # x_aug = [x, g1*x, ..., gG*x]: 128-aligned lane-blocks, VPU splat-mults.
    x_aug = jnp.concatenate(
        [x if k == 0 else g_ref[0, k] * x for k in range(g1)], axis=1)
    # h = relu(x @ (p0 + g·basis)_W1 + b1_proj); bias rows are inside w1_ref.
    h = jnp.dot(x_aug.astype(w_dtype), w1_ref[...],
                preferred_element_type=jnp.float32)
    h = jnp.maximum(h, 0.0)          # column `hidden` of h is exactly 1.0

    # Same augmented trick for layer 2 (bias carried by h's "1" column).
    h_aug = jnp.concatenate(
        [h if k == 0 else g_ref[0, k] * h for k in range(g1)], axis=1)
    out = jnp.dot(h_aug.astype(w_dtype), w2_ref[...],
                  preferred_element_type=jnp.float32)
    out_ref[...] = out.astype(out_ref.dtype)


# ----------------------------------------------------------------------------
# Host-side (setup-time) packing: flat p0/basis -> two lane-dense weight slabs
# ----------------------------------------------------------------------------
def pack_gspace(p0_flat, basis_flat, d_in, hidden, d_out, dtype=jnp.float32):
    """Pack flat p0 (N,) and basis (G, N) into two augmented weight slabs.

    Flat layout follows PyTorch nn.Linear order:
      [W1 (hidden, d_in), b1 (hidden), W2 (d_out, hidden), b2 (d_out)]
    (weights stored (out_features, in_features) -> transposed while packing).

    Slab layout (per k-block of rows, k = 0 is p0, k >= 1 is basis vector k):
      layer-1 slab ((G+1)*DI_P, H_P):
        rows 0..d_in-1  : W1_k^T            (cols 0..hidden-1)
        row  d_in       : b1_k              (+ a 1.0 at col `hidden` for k==0,
                                              the bias carrier for layer 2)
        remaining rows / cols : 0
      layer-2 slab ((G+1)*H_P, DO_P): same with W2_k^T / b2_k.
    """
    G = basis_flat.shape[0]
    di_p = _round_up(d_in + 1, LANE)     # +1: bias-carrier column of x
    h_p = _round_up(hidden + 1, LANE)    # +1: bias-carrier column of h
    do_p = _round_up(d_out, LANE)

    all_vecs = jnp.concatenate(
        [p0_flat[None, :].astype(jnp.float32),
         basis_flat.astype(jnp.float32)], axis=0)           # (G+1, N)

    o1 = hidden * d_in
    o2 = o1 + hidden
    o3 = o2 + d_out * hidden
    o4 = o3 + d_out

    w1 = all_vecs[:, :o1].reshape(G + 1, hidden, d_in).transpose(0, 2, 1)
    b1 = all_vecs[:, o1:o2]                                  # (G+1, hidden)
    w2 = all_vecs[:, o2:o3].reshape(G + 1, d_out, hidden).transpose(0, 2, 1)
    b2 = all_vecs[:, o3:o4]                                  # (G+1, d_out)

    w1_slab = jnp.zeros((G + 1, di_p, h_p), jnp.float32)
    w1_slab = w1_slab.at[:, :d_in, :hidden].set(w1)
    w1_slab = w1_slab.at[:, d_in, :hidden].set(b1)
    w1_slab = w1_slab.at[0, d_in, hidden].set(1.0)           # layer-2 bias carrier
    w1_slab = w1_slab.reshape((G + 1) * di_p, h_p).astype(dtype)

    w2_slab = jnp.zeros((G + 1, h_p, do_p), jnp.float32)
    w2_slab = w2_slab.at[:, :hidden, :d_out].set(w2)
    w2_slab = w2_slab.at[:, hidden, :d_out].set(b2)
    w2_slab = w2_slab.reshape((G + 1) * h_p, do_p).astype(dtype)

    dims = (d_in, hidden, d_out, di_p, h_p, do_p)
    return w1_slab, w2_slab, dims


# ----------------------------------------------------------------------------
# GModel.forward: single fused pallas_call, jitted
# ----------------------------------------------------------------------------
@partial(jax.jit, static_argnames=("dims",))
def gmodel_forward(x, g, w1_slab, w2_slab, *, dims):
    d_in, hidden, d_out, di_p, h_p, do_p = dims
    B = x.shape[0]
    g2 = g.reshape(1, -1).astype(jnp.float32)
    g_full = jnp.concatenate([jnp.ones((1, 1), jnp.float32), g2], axis=1)
    G1 = g_full.shape[1]                                     # G + 1

    # Lane-dense input slab: pad features to di_p, plant the bias-carrier 1.
    tile_b = min(128, _round_up(B, 8))
    b_pad = _round_up(B, tile_b)
    x_pad = jnp.zeros((b_pad, di_p), jnp.float32)
    x_pad = x_pad.at[:B, :d_in].set(x.astype(jnp.float32))
    x_pad = x_pad.at[:B, d_in].set(1.0)

    itemsize = jnp.dtype(w1_slab.dtype).itemsize
    flops = 2 * b_pad * G1 * (di_p * h_p + h_p * do_p)
    bytes_accessed = (w1_slab.size * itemsize + w2_slab.size * itemsize
                      + 4 * (x_pad.size + b_pad * do_p + g_full.size))

    out_pad = pl.pallas_call(
        _gmodel_fused_kernel,
        out_shape=jax.ShapeDtypeStruct((b_pad, do_p), jnp.float32),
        grid_spec=pltpu.PrefetchScalarGridSpec(
            num_scalar_prefetch=0,
            grid=(b_pad // tile_b,),
            in_specs=[
                pl.BlockSpec(memory_space=pltpu.MemorySpace.SMEM),      # g
                pl.BlockSpec((tile_b, di_p), lambda i: (i, 0)),         # x
                pl.BlockSpec((G1 * di_p, h_p), lambda i: (0, 0)),       # W1 slab
                pl.BlockSpec((G1 * h_p, do_p), lambda i: (0, 0)),       # W2 slab
            ],
            out_specs=pl.BlockSpec((tile_b, do_p), lambda i: (i, 0)),
        ),
        compiler_params=pltpu.CompilerParams(
            dimension_semantics=("parallel",)),
        cost_estimate=pl.CostEstimate(
            flops=flops, transcendentals=0, bytes_accessed=bytes_accessed),
    )(g_full, x_pad, w1_slab, w2_slab)

    # Slice the lane-padded (unmasked-store) output slab back to (B, d_out).
    return out_pad[:B, :d_out]


if __name__ == "__main__":
    # Small shapes: batch=8, in=32, hidden=32, out=16, G-space dim=8.
    B, D_IN, H, D_OUT, G = 8, 32, 32, 16, 8
    N = (H * D_IN + H) + (D_OUT * H + D_OUT)                 # 1584 flat params

    key = jax.random.PRNGKey(0)
    k_x, k_p0, k_basis, k_g = jax.random.split(key, 4)

    # Deterministic initial params (PyTorch flat layout), basis, g, and input.
    p0_flat = jax.random.normal(k_p0, (N,), jnp.float32) * 0.1
    basis_flat = jax.random.normal(k_basis, (G, N), jnp.float32) * 0.05
    g = jax.random.normal(k_g, (1, G), jnp.float32)
    x = jax.random.normal(k_x, (B, D_IN), jnp.float32)

    # Plain-JAX reference: backward projection then Linear -> ReLU -> Linear.
    flat = p0_flat + (g @ basis_flat)[0]
    o1 = H * D_IN
    o2 = o1 + H
    o3 = o2 + D_OUT * H
    o4 = o3 + D_OUT
    W1r = flat[:o1].reshape(H, D_IN)        # PyTorch (out_features, in_features)
    b1r = flat[o1:o2]
    W2r = flat[o2:o3].reshape(D_OUT, H)
    b2r = flat[o3:o4]
    ref = jnp.maximum(x @ W1r.T + b1r, 0.0) @ W2r.T + b2r

    # --- f32 parameter slabs: tight correctness check ------------------------
    w1_f32, w2_f32, dims = pack_gspace(p0_flat, basis_flat, D_IN, H, D_OUT,
                                       dtype=jnp.float32)
    out_f32 = jax.block_until_ready(
        gmodel_forward(x, g, w1_f32, w2_f32, dims=dims))
    assert out_f32.shape == (B, D_OUT)
    assert jnp.allclose(out_f32, ref, atol=1e-3, rtol=1e-3)

    # --- bf16 parameter slabs (halves basis HBM traffic, bf16 MXU) -----------
    # Looser check vs the f32 reference: ~0.2% per-element quantization over
    # a K ~ 1.2k accumulation; f32 accumulation inside the MXU.
    w1_bf, w2_bf, dims_bf = pack_gspace(p0_flat, basis_flat, D_IN, H, D_OUT,
                                        dtype=jnp.bfloat16)
    out_bf = jax.block_until_ready(
        gmodel_forward(x, g, w1_bf, w2_bf, dims=dims_bf))
    assert out_bf.shape == (B, D_OUT)
    assert float(jnp.max(jnp.abs(out_bf - ref))) < 0.15

    print("KERNEL_OK")
</pallas_src>

<mosaic_0001>
module attributes {stable_mosaic.version = 11 : i64} {
  func.func @_gmodel_fused_kernel(%arg0: i32, %arg1: memref<1x9xf32, #tpu.memory_space<smem>>, %arg2: memref<8x128xf32, #tpu.memory_space<vmem>>, %arg3: memref<1152x128xf32, #tpu.memory_space<vmem>>, %arg4: memref<1152x128xf32, #tpu.memory_space<vmem>>, %arg5: memref<8x128xf32, #tpu.memory_space<vmem>>) attributes {dimension_semantics = [#tpu.dimension_semantics<parallel>], iteration_bounds = array<i64: 1>, scalar_prefetch = 0 : i64, scratch_operands = 0 : i64, tpu.core_type = #tpu.core_type<tc>, window_params = [{transform_indices = @transform_0, window_bounds = array<i64: 1, 9>}, {transform_indices = @transform_1, window_bounds = array<i64: 8, 128>}, {pipeline_mode = #tpu.pipeline_mode<synchronous>, transform_indices = @transform_2, window_bounds = array<i64: 1152, 128>}, {pipeline_mode = #tpu.pipeline_mode<synchronous>, transform_indices = @transform_3, window_bounds = array<i64: 1152, 128>}, {transform_indices = @transform_4, window_bounds = array<i64: 8, 128>}]} {
    %c0 = arith.constant 0 : index
    %c0_0 = arith.constant 0 : index
    %0 = vector.load %arg2[%c0, %c0_0] : memref<8x128xf32, #tpu.memory_space<vmem>>, vector<8x128xf32>
    %c0_1 = arith.constant 0 : index
    %c1 = arith.constant 1 : index
    %1 = memref.load %arg1[%c0_1, %c1] : memref<1x9xf32, #tpu.memory_space<smem>>
    %2 = vector.broadcast %1 : f32 to vector<8x128xf32>
    %3 = arith.mulf %2, %0 : vector<8x128xf32>
    %c0_2 = arith.constant 0 : index
    %c2 = arith.constant 2 : index
    %4 = memref.load %arg1[%c0_2, %c2] : memref<1x9xf32, #tpu.memory_space<smem>>
    %5 = vector.broadcast %4 : f32 to vector<8x128xf32>
    %6 = arith.mulf %5, %0 : vector<8x128xf32>
    %c0_3 = arith.constant 0 : index
    %c3 = arith.constant 3 : index
    %7 = memref.load %arg1[%c0_3, %c3] : memref<1x9xf32, #tpu.memory_space<smem>>
    %8 = vector.broadcast %7 : f32 to vector<8x128xf32>
    %9 = arith.mulf %8, %0 : vector<8x128xf32>
    %c0_4 = arith.constant 0 : index
    %c4 = arith.constant 4 : index
    %10 = memref.load %arg1[%c0_4, %c4] : memref<1x9xf32, #tpu.memory_space<smem>>
    %11 = vector.broadcast %10 : f32 to vector<8x128xf32>
    %12 = arith.mulf %11, %0 : vector<8x128xf32>
    %c0_5 = arith.constant 0 : index
    %c5 = arith.constant 5 : index
    %13 = memref.load %arg1[%c0_5, %c5] : memref<1x9xf32, #tpu.memory_space<smem>>
    %14 = vector.broadcast %13 : f32 to vector<8x128xf32>
    %15 = arith.mulf %14, %0 : vector<8x128xf32>
    %c0_6 = arith.constant 0 : index
    %c6 = arith.constant 6 : index
    %16 = memref.load %arg1[%c0_6, %c6] : memref<1x9xf32, #tpu.memory_space<smem>>
    %17 = vector.broadcast %16 : f32 to vector<8x128xf32>
    %18 = arith.mulf %17, %0 : vector<8x128xf32>
    %c0_7 = arith.constant 0 : index
    %c7 = arith.constant 7 : index
    %19 = memref.load %arg1[%c0_7, %c7] : memref<1x9xf32, #tpu.memory_space<smem>>
    %20 = vector.broadcast %19 : f32 to vector<8x128xf32>
    %21 = arith.mulf %20, %0 : vector<8x128xf32>
    %c0_8 = arith.constant 0 : index
    %c8 = arith.constant 8 : index
    %22 = memref.load %arg1[%c0_8, %c8] : memref<1x9xf32, #tpu.memory_space<smem>>
    %23 = vector.broadcast %22 : f32 to vector<8x128xf32>
    %24 = arith.mulf %23, %0 : vector<8x128xf32>
    %25 = tpu.concatenate %0, %3, %6, %9, %12, %15, %18, %21, %24 in 1 : vector<8x128xf32>, vector<8x128xf32>, vector<8x128xf32>, vector<8x128xf32>, vector<8x128xf32>, vector<8x128xf32>, vector<8x128xf32>, vector<8x128xf32>, vector<8x128xf32> -> vector<8x1152xf32>
    %c0_9 = arith.constant 0 : index
    %c0_10 = arith.constant 0 : index
    %26 = vector.load %arg3[%c0_9, %c0_10] : memref<1152x128xf32, #tpu.memory_space<vmem>>, vector<1152x128xf32>
    %cst = arith.constant dense<0.000000e+00> : vector<8x128xf32>
    %27 = tpu.matmul %25, %26, %cst {dimension_numbers = #tpu.dot_dimension_numbers<[1], [0], [0], [1], [0, 0, 1, 1], [], []>} : vector<8x1152xf32>, vector<1152x128xf32>, vector<8x128xf32> -> vector<8x128xf32>
    %cst_11 = arith.constant 0.000000e+00 : f32
    %28 = vector.broadcast %cst_11 : f32 to vector<8x128xf32>
    %29 = arith.maximumf %27, %28 : vector<8x128xf32>
    %c0_12 = arith.constant 0 : index
    %c1_13 = arith.constant 1 : index
    %30 = memref.load %arg1[%c0_12, %c1_13] : memref<1x9xf32, #tpu.memory_space<smem>>
    %31 = vector.broadcast %30 : f32 to vector<8x128xf32>
    %32 = arith.mulf %31, %29 : vector<8x128xf32>
    %c0_14 = arith.constant 0 : index
    %c2_15 = arith.constant 2 : index
    %33 = memref.load %arg1[%c0_14, %c2_15] : memref<1x9xf32, #tpu.memory_space<smem>>
    %34 = vector.broadcast %33 : f32 to vector<8x128xf32>
    %35 = arith.mulf %34, %29 : vector<8x128xf32>
    %c0_16 = arith.constant 0 : index
    %c3_17 = arith.constant 3 : index
    %36 = memref.load %arg1[%c0_16, %c3_17] : memref<1x9xf32, #tpu.memory_space<smem>>
    %37 = vector.broadcast %36 : f32 to vector<8x128xf32>
    %38 = arith.mulf %37, %29 : vector<8x128xf32>
    %c0_18 = arith.constant 0 : index
    %c4_19 = arith.constant 4 : index
    %39 = memref.load %arg1[%c0_18, %c4_19] : memref<1x9xf32, #tpu.memory_space<smem>>
    %40 = vector.broadcast %39 : f32 to vector<8x128xf32>
    %41 = arith.mulf %40, %29 : vector<8x128xf32>
    %c0_20 = arith.constant 0 : index
    %c5_21 = arith.constant 5 : index
    %42 = memref.load %arg1[%c0_20, %c5_21] : memref<1x9xf32, #tpu.memory_space<smem>>
    %43 = vector.broadcast %42 : f32 to vector<8x128xf32>
    %44 = arith.mulf %43, %29 : vector<8x128xf32>
    %c0_22 = arith.constant 0 : index
    %c6_23 = arith.constant 6 : index
    %45 = memref.load %arg1[%c0_22, %c6_23] : memref<1x9xf32, #tpu.memory_space<smem>>
    %46 = vector.broadcast %45 : f32 to vector<8x128xf32>
    %47 = arith.mulf %46, %29 : vector<8x128xf32>
    %c0_24 = arith.constant 0 : index
    %c7_25 = arith.constant 7 : index
    %48 = memref.load %arg1[%c0_24, %c7_25] : memref<1x9xf32, #tpu.memory_space<smem>>
    %49 = vector.broadcast %48 : f32 to vector<8x128xf32>
    %50 = arith.mulf %49, %29 : vector<8x128xf32>
    %c0_26 = arith.constant 0 : index
    %c8_27 = arith.constant 8 : index
    %51 = memref.load %arg1[%c0_26, %c8_27] : memref<1x9xf32, #tpu.memory_space<smem>>
    %52 = vector.broadcast %51 : f32 to vector<8x128xf32>
    %53 = arith.mulf %52, %29 : vector<8x128xf32>
    %54 = tpu.concatenate %29, %32, %35, %38, %41, %44, %47, %50, %53 in 1 : vector<8x128xf32>, vector<8x128xf32>, vector<8x128xf32>, vector<8x128xf32>, vector<8x128xf32>, vector<8x128xf32>, vector<8x128xf32>, vector<8x128xf32>, vector<8x128xf32> -> vector<8x1152xf32>
    %c0_28 = arith.constant 0 : index
    %c0_29 = arith.constant 0 : index
    %55 = vector.load %arg4[%c0_28, %c0_29] : memref<1152x128xf32, #tpu.memory_space<vmem>>, vector<1152x128xf32>
    %cst_30 = arith.constant dense<0.000000e+00> : vector<8x128xf32>
    %56 = tpu.matmul %54, %55, %cst_30 {dimension_numbers = #tpu.dot_dimension_numbers<[1], [0], [0], [1], [0, 0, 1, 1], [], []>} : vector<8x1152xf32>, vector<1152x128xf32>, vector<8x128xf32> -> vector<8x128xf32>
    %c0_31 = arith.constant 0 : index
    %c0_32 = arith.constant 0 : index
    %57 = vector.load %arg5[%c0_31, %c0_32] : memref<8x128xf32, #tpu.memory_space<vmem>>, vector<8x128xf32>
    tpu.vector_store %arg5[%c0_31, %c0_32], %56 {strides = array<i32>} : memref<8x128xf32, #tpu.memory_space<vmem>>, vector<8x128xf32>,
    return
  }
  func.func @transform_0(%arg0: i32) -> (i32, i32) {
    %c0_i32 = arith.constant 0 : i32
    %c0_i32_0 = arith.constant 0 : i32
    %c0_i32_1 = arith.constant 0 : i32
    return %c0_i32, %c0_i32_0 : i32, i32
  }
  func.func @transform_1(%arg0: i32) -> (i32, i32) {
    %c0_i32 = arith.constant 0 : i32
    %c0_i32_0 = arith.constant 0 : i32
    return %arg0, %c0_i32 : i32, i32
  }
  func.func @transform_2(%arg0: i32) -> (i32, i32) {
    %c0_i32 = arith.constant 0 : i32
    %c0_i32_0 = arith.constant 0 : i32
    %c0_i32_1 = arith.constant 0 : i32
    return %c0_i32, %c0_i32_0 : i32, i32
  }
  func.func @transform_3(%arg0: i32) -> (i32, i32) {
    %c0_i32 = arith.constant 0 : i32
    %c0_i32_0 = arith.constant 0 : i32
    %c0_i32_1 = arith.constant 0 : i32
    return %c0_i32, %c0_i32_0 : i32, i32
  }
  func.func @transform_4(%arg0: i32) -> (i32, i32) {
    %c0_i32 = arith.constant 0 : i32
    %c0_i32_0 = arith.constant 0 : i32
    return %arg0, %c0_i32 : i32, i32
  }
}

</mosaic_0001>

<llo_original>
// kernel: gmodel_forward.1
$region0: #{gmodel_forward.1}
  #allocation0 [shape = 'u32[]', space=smem, size = 0x4, offset = 0x4, fixed_abs, tag = 'smem constant byte address 0x4 - core index']
  #allocation1 [shape = 'u32[72,128]{1,0:T(1,128)}', space=vmem, size = 0x9000, scoped, tag = 'internal scratch']
  %s0 = inlined_call_operand.vmem [shape: f32[1,9], index: 0, kind: input, shape index: {}]
  %s1 = inlined_call_operand.vmem [shape: f32[8,128], index: 1, kind: input, shape index: {}]
  %s2 = inlined_call_operand.hbm [shape: f32[1152,128], index: 2, kind: input, shape index: {}]
  %s3 = inlined_call_operand.hbm [shape: f32[1152,128], index: 3, kind: input, shape index: {}]
  %s4 = inlined_call_operand.hbm [shape: f32[8,128], index: 4, kind: output, shape index: {}]
  %s5 = sld [smem:[#allocation0]]
  $region38: #{gmodel_forward.1} parent=0
    _
  %s7 = ssub.s32 1, %s5
  %s8 = scalar_select 0, %s7, %s5
  $region1: #{gmodel_forward.1} parent=0
    #allocation2 [shape = 'u8[512]{0}', space=smem, size = 0x200, scoped, tag = 'input window, operand 0, single buffered']
    #allocation3 [shape = 's32[1]{0}', space=sflag, size = 0x4, scoped, tag = 'scoped memory for gmodel_forward.1']
    #allocation4 [shape = 's32[1]{0}', space=sflag, size = 0x4, scoped, tag = 'scoped memory for gmodel_forward.1']
    #allocation5 [shape = 's32[1]{0}', space=sflag, size = 0x4, scoped, tag = 'scoped memory for gmodel_forward.1']
    #allocation6 [shape = 'u8[589824]{0}', space=vmem, size = 0x90000, scoped, tag = 'input window, operand 2, single buffered']
    #allocation7 [shape = 'u8[589824]{0}', space=vmem, size = 0x90000, scoped, tag = 'input window, operand 3, single buffered']
    #allocation8 [shape = 's32[1]{0}', space=sflag, size = 0x4, scoped, tag = 'scoped memory for gmodel_forward.1']
    #allocation9 [shape = 'u8[4096]{0}', space=vmem, size = 0x1000, scoped, tag = 'output window, operand 0, single buffered']
    %9 = vsyncpa [#allocation5], 0
    %10 = vsyncpa [#allocation3], 0
    %11 = vsyncpa [#allocation8], 0
    %12 = vsyncpa [#allocation4], 0
    // Predicated region
    $region2: #{gmodel_forward.1} parent=1 // pred_check
      _
    $region3: #{gmodel_forward.1} parent=1 // pred_check_branch
      %14 = sbr.rel (0) target = $region5
    $region4: #{gmodel_forward.1} parent=1 // pred_region
      %16 = vsyncadd [#allocation5], 0
      %s18 = sshll.u32 %s0, 4
      %s19 = int_to_ptr.vmem [resolvable:$true] %s18
      %21 = dma.vmem_to_smem %s19, 16, [#allocation2], [#allocation5]
    $region5: #{gmodel_forward.1} parent=1 // pred_fallthru
      _
    // Predicated region
    $region6: #{gmodel_forward.1} parent=1 // pred_check
      _
    $region7: #{gmodel_forward.1} parent=1 // pred_check_branch
      %23 = sbr.rel (0) target = $region9
    $region8: #{gmodel_forward.1} parent=1 // pred_region
      _
    $region9: #{gmodel_forward.1} parent=1 // pred_fallthru
      _
    // Predicated region
    $region10: #{gmodel_forward.1} parent=1 // pred_check
      _
    $region11: #{gmodel_forward.1} parent=1 // pred_check_branch
      %25 = sbr.rel (0) target = $region13
    $region12: #{gmodel_forward.1} parent=1 // pred_region
      %27 = vsyncadd [#allocation3], 0
      %s28 = sshll.u32 %s2, 4
      %s29 = int_to_ptr.hbm [resolvable:$true] %s28
      %s30 = sshll.u32 [#allocation6], 4
      %s31 = int_to_ptr.vmem [resolvable:$true] %s30
      %36 = dma.hbm_to_vmem [thread:$0]  %s29, 18432, %s31, [#allocation3], 128, 128, 8
    $region13: #{gmodel_forward.1} parent=1 // pred_fallthru
      _
    // Predicated region
    $region14: #{gmodel_forward.1} parent=1 // pred_check
      _
    $region15: #{gmodel_forward.1} parent=1 // pred_check_branch
      %38 = sbr.rel (0) target = $region17
    $region16: #{gmodel_forward.1} parent=1 // pred_region
      %40 = vsyncadd [#allocation8], 0
      %s41 = sshll.u32 %s3, 4
      %s42 = int_to_ptr.hbm [resolvable:$true] %s41
      %s43 = sshll.u32 [#allocation7], 4
      %s44 = int_to_ptr.vmem [resolvable:$true] %s43
      %49 = dma.hbm_to_vmem [thread:$0]  %s42, 18432, %s44, [#allocation8], 128, 128, 8
    $region17: #{gmodel_forward.1} parent=1 // pred_fallthru
      _
    // Predicated region
    $region18: #{gmodel_forward.1} parent=1 // pred_check
      _
    $region19: #{gmodel_forward.1} parent=1 // pred_check_branch
      %51 = sbr.rel (0) target = $region21
    $region20: #{gmodel_forward.1} parent=1 // pred_region
      %53 = dma.done [#allocation5], 16
    $region21: #{gmodel_forward.1} parent=1 // pred_fallthru
      _
    // Predicated region
    $region22: #{gmodel_forward.1} parent=1 // pred_check
      _
    $region23: #{gmodel_forward.1} parent=1 // pred_check_branch
      %55 = sbr.rel (0) target = $region25
    $region24: #{gmodel_forward.1} parent=1 // pred_region
      %57 = dma.done [#allocation3], 18432
    $region25: #{gmodel_forward.1} parent=1 // pred_fallthru
      _
    // Predicated region
    $region26: #{gmodel_forward.1} parent=1 // pred_check
      _
    $region27: #{gmodel_forward.1} parent=1 // pred_check_branch
      %59 = sbr.rel (0) target = $region29
    $region28: #{gmodel_forward.1} parent=1 // pred_region
      %61 = dma.done [#allocation8], 18432
    $region29: #{gmodel_forward.1} parent=1 // pred_fallthru
      _
    %62 = sfence
    %v63 = vld [vmem:[%s1] sm:$0xff]
    %s64 = sld [smem:[#allocation2 + $0x1]]
    %v65 = vstv %s64
    %v66 = vmul.f32 %v65, %v63
    %s67 = sld [smem:[#allocation2 + $0x2]]
    %v68 = vstv %s67
    %v69 = vmul.f32 %v68, %v63
    %s70 = sld [smem:[#allocation2 + $0x3]]
    %v71 = vstv %s70
    %v72 = vmul.f32 %v71, %v63
    %s73 = sld [smem:[#allocation2 + $0x4]]
    %v74 = vstv %s73
    %v75 = vmul.f32 %v74, %v63
    %s76 = sld [smem:[#allocation2 + $0x5]]
    %v77 = vstv %s76
    %v78 = vmul.f32 %v77, %v63
    %s79 = sld [smem:[#allocation2 + $0x6]]
    %v80 = vstv %s79
    %v81 = vmul.f32 %v80, %v63
    %s82 = sld [smem:[#allocation2 + $0x7]]
    %v83 = vstv %s82
    %v84 = vmul.f32 %v83, %v63
    %s85 = sld [smem:[#allocation2 + $0x8]]
    %v86 = vstv %s85
    %v87 = vmul.f32 %v86, %v63
    %v88 = vld [vmem:[#allocation6] sm:$0xff]
    %v89 = vld [vmem:[#allocation6 + $0x8] sm:$0xff]
    %v90 = vld [vmem:[#allocation6 + $0x10] sm:$0xff]
    %v91 = vld [vmem:[#allocation6 + $0x18] sm:$0xff]
    %v92 = vld [vmem:[#allocation6 + $0x20] sm:$0xff]
    %v93 = vld [vmem:[#allocation6 + $0x28] sm:$0xff]
    %v94 = vld [vmem:[#allocation6 + $0x30] sm:$0xff]
    %v95 = vld [vmem:[#allocation6 + $0x38] sm:$0xff]
    %v96 = vld [vmem:[#allocation6 + $0x40] sm:$0xff]
    %v97 = vld [vmem:[#allocation6 + $0x48] sm:$0xff]
    %v98 = vld [vmem:[#allocation6 + $0x50] sm:$0xff]
    %v99 = vld [vmem:[#allocation6 + $0x58] sm:$0xff]
    %v100 = vld [vmem:[#allocation6 + $0x60] sm:$0xff]
    %v101 = vld [vmem:[#allocation6 + $0x68] sm:$0xff]
    %v102 = vld [vmem:[#allocation6 + $0x70] sm:$0xff]
    %v103 = vld [vmem:[#allocation6 + $0x78] sm:$0xff]
    %v104 = vld [vmem:[#allocation6 + $0x80] sm:$0xff]
    %v105 = vld [vmem:[#allocation6 + $0x88] sm:$0xff]
    %v106 = vld [vmem:[#allocation6 + $0x90] sm:$0xff]
    %v107 = vld [vmem:[#allocation6 + $0x98] sm:$0xff]
    %v108 = vld [vmem:[#allocation6 + $0xa0] sm:$0xff]
    %v109 = vld [vmem:[#allocation6 + $0xa8] sm:$0xff]
    %v110 = vld [vmem:[#allocation6 + $0xb0] sm:$0xff]
    %v111 = vld [vmem:[#allocation6 + $0xb8] sm:$0xff]
    %v112 = vld [vmem:[#allocation6 + $0xc0] sm:$0xff]
    %v113 = vld [vmem:[#allocation6 + $0xc8] sm:$0xff]
    %v114 = vld [vmem:[#allocation6 + $0xd0] sm:$0xff]
    %v115 = vld [vmem:[#allocation6 + $0xd8] sm:$0xff]
    %v116 = vld [vmem:[#allocation6 + $0xe0] sm:$0xff]
    %v117 = vld [vmem:[#allocation6 + $0xe8] sm:$0xff]
    %v118 = vld [vmem:[#allocation6 + $0xf0] sm:$0xff]
    %v119 = vld [vmem:[#allocation6 + $0xf8] sm:$0xff]
    %v120 = vld [vmem:[#allocation6 + $0x100] sm:$0xff]
    %v121 = vld [vmem:[#allocation6 + $0x108] sm:$0xff]
    %v122 = vld [vmem:[#allocation6 + $0x110] sm:$0xff]
    %v123 = vld [vmem:[#allocation6 + $0x118] sm:$0xff]
    %v124 = vld [vmem:[#allocation6 + $0x120] sm:$0xff]
    %v125 = vld [vmem:[#allocation6 + $0x128] sm:$0xff]
    %v126 = vld [vmem:[#allocation6 + $0x130] sm:$0xff]
    %v127 = vld [vmem:[#allocation6 + $0x138] sm:$0xff]
    %v128 = vld [vmem:[#allocation6 + $0x140] sm:$0xff]
    %v129 = vld [vmem:[#allocation6 + $0x148] sm:$0xff]
    %v130 = vld [vmem:[#allocation6 + $0x150] sm:$0xff]
    %v131 = vld [vmem:[#allocation6 + $0x158] sm:$0xff]
    %v132 = vld [vmem:[#allocation6 + $0x160] sm:$0xff]
    %v133 = vld [vmem:[#allocation6 + $0x168] sm:$0xff]
    %v134 = vld [vmem:[#allocation6 + $0x170] sm:$0xff]
    %v135 = vld [vmem:[#allocation6 + $0x178] sm:$0xff]
    %v136 = vld [vmem:[#allocation6 + $0x180] sm:$0xff]
    %v137 = vld [vmem:[#allocation6 + $0x188] sm:$0xff]
    %v138 = vld [vmem:[#allocation6 + $0x190] sm:$0xff]
    %v139 = vld [vmem:[#allocation6 + $0x198] sm:$0xff]
    %v140 = vld [vmem:[#allocation6 + $0x1a0] sm:$0xff]
    %v141 = vld [vmem:[#allocation6 + $0x1a8] sm:$0xff]
    %v142 = vld [vmem:[#allocation6 + $0x1b0] sm:$0xff]
    %v143 = vld [vmem:[#allocation6 + $0x1b8] sm:$0xff]
    %v144 = vld [vmem:[#allocation6 + $0x1c0] sm:$0xff]
    %v145 = vld [vmem:[#allocation6 + $0x1c8] sm:$0xff]
    %v146 = vld [vmem:[#allocation6 + $0x1d0] sm:$0xff]
    %v147 = vld [vmem:[#allocation6 + $0x1d8] sm:$0xff]
    %v148 = vld [vmem:[#allocation6 + $0x1e0] sm:$0xff]
    %v149 = vld [vmem:[#allocation6 + $0x1e8] sm:$0xff]
    %v150 = vld [vmem:[#allocation6 + $0x1f0] sm:$0xff]
    %v151 = vld [vmem:[#allocation6 + $0x1f8] sm:$0xff]
    %v152 = vld [vmem:[#allocation6 + $0x200] sm:$0xff]
    %v153 = vld [vmem:[#allocation6 + $0x208] sm:$0xff]
    %v154 = vld [vmem:[#allocation6 + $0x210] sm:$0xff]
    %v155 = vld [vmem:[#allocation6 + $0x218] sm:$0xff]
    %v156 = vld [vmem:[#allocation6 + $0x220] sm:$0xff]
    %v157 = vld [vmem:[#allocation6 + $0x228] sm:$0xff]
    %v158 = vld [vmem:[#allocation6 + $0x230] sm:$0xff]
    %v159 = vld [vmem:[#allocation6 + $0x238] sm:$0xff]
    %v160 = vld [vmem:[#allocation6 + $0x240] sm:$0xff]
    %v161 = vld [vmem:[#allocation6 + $0x248] sm:$0xff]
    %v162 = vld [vmem:[#allocation6 + $0x250] sm:$0xff]
    %v163 = vld [vmem:[#allocation6 + $0x258] sm:$0xff]
    %v164 = vld [vmem:[#allocation6 + $0x260] sm:$0xff]
    %v165 = vld [vmem:[#allocation6 + $0x268] sm:$0xff]
    %v166 = vld [vmem:[#allocation6 + $0x270] sm:$0xff]
    %v167 = vld [vmem:[#allocation6 + $0x278] sm:$0xff]
    %v168 = vld [vmem:[#allocation6 + $0x280] sm:$0xff]
    %v169 = vld [vmem:[#allocation6 + $0x288] sm:$0xff]
    %v170 = vld [vmem:[#allocation6 + $0x290] sm:$0xff]
    %v171 = vld [vmem:[#allocation6 + $0x298] sm:$0xff]
    %v172 = vld [vmem:[#allocation6 + $0x2a0] sm:$0xff]
    %v173 = vld [vmem:[#allocation6 + $0x2a8] sm:$0xff]
    %v174 = vld [vmem:[#allocation6 + $0x2b0] sm:$0xff]
    %v175 = vld [vmem:[#allocation6 + $0x2b8] sm:$0xff]
    %v176 = vld [vmem:[#allocation6 + $0x2c0] sm:$0xff]
    %v177 = vld [vmem:[#allocation6 + $0x2c8] sm:$0xff]
    %v178 = vld [vmem:[#allocation6 + $0x2d0] sm:$0xff]
    %v179 = vld [vmem:[#allocation6 + $0x2d8] sm:$0xff]
    %v180 = vld [vmem:[#allocation6 + $0x2e0] sm:$0xff]
    %v181 = vld [vmem:[#allocation6 + $0x2e8] sm:$0xff]
    %v182 = vld [vmem:[#allocation6 + $0x2f0] sm:$0xff]
    %v183 = vld [vmem:[#allocation6 + $0x2f8] sm:$0xff]
    %v184 = vld [vmem:[#allocation6 + $0x300] sm:$0xff]
    %v185 = vld [vmem:[#allocation6 + $0x308] sm:$0xff]
    %v186 = vld [vmem:[#allocation6 + $0x310] sm:$0xff]
    %v187 = vld [vmem:[#allocation6 + $0x318] sm:$0xff]
    %v188 = vld [vmem:[#allocation6 + $0x320] sm:$0xff]
    %v189 = vld [vmem:[#allocation6 + $0x328] sm:$0xff]
    %v190 = vld [vmem:[#allocation6 + $0x330] sm:$0xff]
    %v191 = vld [vmem:[#allocation6 + $0x338] sm:$0xff]
    %v192 = vld [vmem:[#allocation6 + $0x340] sm:$0xff]
    %v193 = vld [vmem:[#allocation6 + $0x348] sm:$0xff]
    %v194 = vld [vmem:[#allocation6 + $0x350] sm:$0xff]
    %v195 = vld [vmem:[#allocation6 + $0x358] sm:$0xff]
    %v196 = vld [vmem:[#allocation6 + $0x360] sm:$0xff]
    %v197 = vld [vmem:[#allocation6 + $0x368] sm:$0xff]
    %v198 = vld [vmem:[#allocation6 + $0x370] sm:$0xff]
    %v199 = vld [vmem:[#allocation6 + $0x378] sm:$0xff]
    %v200 = vld [vmem:[#allocation6 + $0x380] sm:$0xff]
    %v201 = vld [vmem:[#allocation6 + $0x388] sm:$0xff]
    %v202 = vld [vmem:[#allocation6 + $0x390] sm:$0xff]
    %v203 = vld [vmem:[#allocation6 + $0x398] sm:$0xff]
    %v204 = vld [vmem:[#allocation6 + $0x3a0] sm:$0xff]
    %v205 = vld [vmem:[#allocation6 + $0x3a8] sm:$0xff]
    %v206 = vld [vmem:[#allocation6 + $0x3b0] sm:$0xff]
    %v207 = vld [vmem:[#allocation6 + $0x3b8] sm:$0xff]
    %v208 = vld [vmem:[#allocation6 + $0x3c0] sm:$0xff]
    %v209 = vld [vmem:[#allocation6 + $0x3c8] sm:$0xff]
    %v210 = vld [vmem:[#allocation6 + $0x3d0] sm:$0xff]
    %v211 = vld [vmem:[#allocation6 + $0x3d8] sm:$0xff]
    %v212 = vld [vmem:[#allocation6 + $0x3e0] sm:$0xff]
    %v213 = vld [vmem:[#allocation6 + $0x3e8] sm:$0xff]
    %v214 = vld [vmem:[#allocation6 + $0x3f0] sm:$0xff]
    %v215 = vld [vmem:[#allocation6 + $0x3f8] sm:$0xff]
    %v216 = vld [vmem:[#allocation6 + $0x400] sm:$0xff]
    %v217 = vld [vmem:[#allocation6 + $0x408] sm:$0xff]
    %v218 = vld [vmem:[#allocation6 + $0x410] sm:$0xff]
    %v219 = vld [vmem:[#allocation6 + $0x418] sm:$0xff]
    %v220 = vld [vmem:[#allocation6 + $0x420] sm:$0xff]
    %v221 = vld [vmem:[#allocation6 + $0x428] sm:$0xff]
    %v222 = vld [vmem:[#allocation6 + $0x430] sm:$0xff]
    %v223 = vld [vmem:[#allocation6 + $0x438] sm:$0xff]
    %v224 = vld [vmem:[#allocation6 + $0x440] sm:$0xff]
    %v225 = vld [vmem:[#allocation6 + $0x448] sm:$0xff]
    %v226 = vld [vmem:[#allocation6 + $0x450] sm:$0xff]
    %v227 = vld [vmem:[#allocation6 + $0x458] sm:$0xff]
    %v228 = vld [vmem:[#allocation6 + $0x460] sm:$0xff]
    %v229 = vld [vmem:[#allocation6 + $0x468] sm:$0xff]
    %v230 = vld [vmem:[#allocation6 + $0x470] sm:$0xff]
    %v231 = vld [vmem:[#allocation6 + $0x478] sm:$0xff]
    %232 = vmatpush.msra.mxu0 %v103
    %233 = vmatpush.msra.mxu0 %v102
    %234 = vmatpush.msra.mxu0 %v101
    %235 = vmatpush.msra.mxu0 %v100
    %236 = vmatpush.msra.mxu0 %v99
    %237 = vmatpush.msra.mxu0 %v98
    %238 = vmatpush.msra.mxu0 %v97
    %239 = vmatpush.msra.mxu0 %v96
    %240 = vmatpush.msra.mxu0 %v95
    %241 = vmatpush.msra.mxu0 %v94
    %242 = vmatpush.msra.mxu0 %v93
    %243 = vmatpush.msra.mxu0 %v92
    %244 = vmatpush.msra.mxu0 %v91
    %245 = vmatpush.msra.mxu0 %v90
    %246 = vmatpush.msra.mxu0 %v89
    %247 = vmatpush.msra.mxu0 %v88
    %248 = vmatmul.f32.gmra.mxu0 %v63
    %v249 = vpop.f32.mrf.mxu0
    %v250 = vadd.f32 0.0, %v249
    %251 = vdwg.mxu0
    %252 = vmatpush.msra.mxu0 %v119
    %253 = vmatpush.msra.mxu0 %v118
    %254 = vmatpush.msra.mxu0 %v117
    %255 = vmatpush.msra.mxu0 %v116
    %256 = vmatpush.msra.mxu0 %v115
    %257 = vmatpush.msra.mxu0 %v114
    %258 = vmatpush.msra.mxu0 %v113
    %259 = vmatpush.msra.mxu0 %v112
    %260 = vmatpush.msra.mxu0 %v111
    %261 = vmatpush.msra.mxu0 %v110
    %262 = vmatpush.msra.mxu0 %v109
    %263 = vmatpush.msra.mxu0 %v108
    %264 = vmatpush.msra.mxu0 %v107
    %265 = vmatpush.msra.mxu0 %v106
    %266 = vmatpush.msra.mxu0 %v105
    %267 = vmatpush.msra.mxu0 %v104
    %268 = vmatmul.f32.gmra.mxu0 %v66
    %v269 = vpop.f32.mrf.mxu0
    %v270 = vadd.f32 %v250, %v269
    %271 = vdwg.mxu0
    %272 = vmatpush.msra.mxu0 %v135
    %273 = vmatpush.msra.mxu0 %v134
    %274 = vmatpush.msra.mxu0 %v133
    %275 = vmatpush.msra.mxu0 %v132
    %276 = vmatpush.msra.mxu0 %v131
    %277 = vmatpush.msra.mxu0 %v130
    %278 = vmatpush.msra.mxu0 %v129
    %279 = vmatpush.msra.mxu0 %v128
    %280 = vmatpush.msra.mxu0 %v127
    %281 = vmatpush.msra.mxu0 %v126
    %282 = vmatpush.msra.mxu0 %v125
    %283 = vmatpush.msra.mxu0 %v124
    %284 = vmatpush.msra.mxu0 %v123
    %285 = vmatpush.msra.mxu0 %v122
    %286 = vmatpush.msra.mxu0 %v121
    %287 = vmatpush.msra.mxu0 %v120
    %288 = vmatmul.f32.gmra.mxu0 %v69
    %v289 = vpop.f32.mrf.mxu0
    %v290 = vadd.f32 %v270, %v289
    %291 = vdwg.mxu0
    %292 = vmatpush.msra.mxu0 %v151
    %293 = vmatpush.msra.mxu0 %v150
    %294 = vmatpush.msra.mxu0 %v149
    %295 = vmatpush.msra.mxu0 %v148
    %296 = vmatpush.msra.mxu0 %v147
    %297 = vmatpush.msra.mxu0 %v146
    %298 = vmatpush.msra.mxu0 %v145
    %299 = vmatpush.msra.mxu0 %v144
    %300 = vmatpush.msra.mxu0 %v143
    %301 = vmatpush.msra.mxu0 %v142
    %302 = vmatpush.msra.mxu0 %v141
    %303 = vmatpush.msra.mxu0 %v140
    %304 = vmatpush.msra.mxu0 %v139
    %305 = vmatpush.msra.mxu0 %v138
    %306 = vmatpush.msra.mxu0 %v137
    %307 = vmatpush.msra.mxu0 %v136
    %308 = vmatmul.f32.gmra.mxu0 %v72
    %v309 = vpop.f32.mrf.mxu0
    %v310 = vadd.f32 %v290, %v309
    %311 = vdwg.mxu0
    %312 = vmatpush.msra.mxu0 %v167
    %313 = vmatpush.msra.mxu0 %v166
    %314 = vmatpush.msra.mxu0 %v165
    %315 = vmatpush.msra.mxu0 %v164
    %316 = vmatpush.msra.mxu0 %v163
    %317 = vmatpush.msra.mxu0 %v162
    %318 = vmatpush.msra.mxu0 %v161
    %319 = vmatpush.msra.mxu0 %v160
    %320 = vmatpush.msra.mxu0 %v159
    %321 = vmatpush.msra.mxu0 %v158
    %322 = vmatpush.msra.mxu0 %v157
    %323 = vmatpush.msra.mxu0 %v156
    %324 = vmatpush.msra.mxu0 %v155
    %325 = vmatpush.msra.mxu0 %v154
    %326 = vmatpush.msra.mxu0 %v153
    %327 = vmatpush.msra.mxu0 %v152
    %328 = vmatmul.f32.gmra.mxu0 %v75
    %v329 = vpop.f32.mrf.mxu0
    %v330 = vadd.f32 %v310, %v329
    %331 = vdwg.mxu0
    %332 = vmatpush.msra.mxu0 %v183
    %333 = vmatpush.msra.mxu0 %v182
    %334 = vmatpush.msra.mxu0 %v181
    %335 = vmatpush.msra.mxu0 %v180
    %336 = vmatpush.msra.mxu0 %v179
    %337 = vmatpush.msra.mxu0 %v178
    %338 = vmatpush.msra.mxu0 %v177
    %339 = vmatpush.msra.mxu0 %v176
    %340 = vmatpush.msra.mxu0 %v175
    %341 = vmatpush.msra.mxu0 %v174
    %342 = vmatpush.msra.mxu0 %v173
    %343 = vmatpush.msra.mxu0 %v172
    %344 = vmatpush.msra.mxu0 %v171
    %345 = vmatpush.msra.mxu0 %v170
    %346 = vmatpush.msra.mxu0 %v169
    %347 = vmatpush.msra.mxu0 %v168
    %348 = vmatmul.f32.gmra.mxu0 %v78
    %v349 = vpop.f32.mrf.mxu0
    %v350 = vadd.f32 %v330, %v349
    %351 = vdwg.mxu0
    %352 = vmatpush.msra.mxu0 %v199
    %353 = vmatpush.msra.mxu0 %v198
    %354 = vmatpush.msra.mxu0 %v197
    %355 = vmatpush.msra.mxu0 %v196
    %356 = vmatpush.msra.mxu0 %v195
    %357 = vmatpush.msra.mxu0 %v194
    %358 = vmatpush.msra.mxu0 %v193
    %359 = vmatpush.msra.mxu0 %v192
    %360 = vmatpush.msra.mxu0 %v191
    %361 = vmatpush.msra.mxu0 %v190
    %362 = vmatpush.msra.mxu0 %v189
    %363 = vmatpush.msra.mxu0 %v188
    %364 = vmatpush.msra.mxu0 %v187
    %365 = vmatpush.msra.mxu0 %v186
    %366 = vmatpush.msra.mxu0 %v185
    %367 = vmatpush.msra.mxu0 %v184
    %368 = vmatmul.f32.gmra.mxu0 %v81
    %v369 = vpop.f32.mrf.mxu0
    %v370 = vadd.f32 %v350, %v369
    %371 = vdwg.mxu0
    %372 = vmatpush.msra.mxu0 %v215
    %373 = vmatpush.msra.mxu0 %v214
    %374 = vmatpush.msra.mxu0 %v213
    %375 = vmatpush.msra.mxu0 %v212
    %376 = vmatpush.msra.mxu0 %v211
    %377 = vmatpush.msra.mxu0 %v210
    %378 = vmatpush.msra.mxu0 %v209
    %379 = vmatpush.msra.mxu0 %v208
    %380 = vmatpush.msra.mxu0 %v207
    %381 = vmatpush.msra.mxu0 %v206
    %382 = vmatpush.msra.mxu0 %v205
    %383 = vmatpush.msra.mxu0 %v204
    %384 = vmatpush.msra.mxu0 %v203
    %385 = vmatpush.msra.mxu0 %v202
    %386 = vmatpush.msra.mxu0 %v201
    %387 = vmatpush.msra.mxu0 %v200
    %388 = vmatmul.f32.gmra.mxu0 %v84
    %v389 = vpop.f32.mrf.mxu0
    %v390 = vadd.f32 %v370, %v389
    %391 = vdwg.mxu0
    %392 = vmatpush.msra.mxu0 %v231
    %393 = vmatpush.msra.mxu0 %v230
    %394 = vmatpush.msra.mxu0 %v229
    %395 = vmatpush.msra.mxu0 %v228
    %396 = vmatpush.msra.mxu0 %v227
    %397 = vmatpush.msra.mxu0 %v226
    %398 = vmatpush.msra.mxu0 %v225
    %399 = vmatpush.msra.mxu0 %v224
    %400 = vmatpush.msra.mxu0 %v223
    %401 = vmatpush.msra.mxu0 %v222
    %402 = vmatpush.msra.mxu0 %v221
    %403 = vmatpush.msra.mxu0 %v220
    %404 = vmatpush.msra.mxu0 %v219
    %405 = vmatpush.msra.mxu0 %v218
    %406 = vmatpush.msra.mxu0 %v217
    %407 = vmatpush.msra.mxu0 %v216
    %408 = vmatmul.f32.gmra.mxu0 %v87
    %v409 = vpop.f32.mrf.mxu0
    %v410 = vadd.f32 %v390, %v409
    %411 = vdwg.mxu0
    %v412 = vmax.f32 %v410, 0.0
    %v413 = vmul.f32 %v65, %v412
    %v414 = vmul.f32 %v68, %v412
    %v415 = vmul.f32 %v71, %v412
    %v416 = vmul.f32 %v74, %v412
    %v417 = vmul.f32 %v77, %v412
    %v418 = vmul.f32 %v80, %v412
    %v419 = vmul.f32 %v83, %v412
    %v420 = vmul.f32 %v86, %v412
    %v421 = vld [vmem:[#allocation7] sm:$0xff]
    %v422 = vld [vmem:[#allocation7 + $0x8] sm:$0xff]
    %v423 = vld [vmem:[#allocation7 + $0x10] sm:$0xff]
    %v424 = vld [vmem:[#allocation7 + $0x18] sm:$0xff]
    %v425 = vld [vmem:[#allocation7 + $0x20] sm:$0xff]
    %v426 = vld [vmem:[#allocation7 + $0x28] sm:$0xff]
    %v427 = vld [vmem:[#allocation7 + $0x30] sm:$0xff]
    %v428 = vld [vmem:[#allocation7 + $0x38] sm:$0xff]
    %v429 = vld [vmem:[#allocation7 + $0x40] sm:$0xff]
    %v430 = vld [vmem:[#allocation7 + $0x48] sm:$0xff]
    %v431 = vld [vmem:[#allocation7 + $0x50] sm:$0xff]
    %v432 = vld [vmem:[#allocation7 + $0x58] sm:$0xff]
    %v433 = vld [vmem:[#allocation7 + $0x60] sm:$0xff]
    %v434 = vld [vmem:[#allocation7 + $0x68] sm:$0xff]
    %v435 = vld [vmem:[#allocation7 + $0x70] sm:$0xff]
    %v436 = vld [vmem:[#allocation7 + $0x78] sm:$0xff]
    %v437 = vld [vmem:[#allocation7 + $0x80] sm:$0xff]
    %v438 = vld [vmem:[#allocation7 + $0x88] sm:$0xff]
    %v439 = vld [vmem:[#allocation7 + $0x90] sm:$0xff]
    %v440 = vld [vmem:[#allocation7 + $0x98] sm:$0xff]
    %v441 = vld [vmem:[#allocation7 + $0xa0] sm:$0xff]
    %v442 = vld [vmem:[#allocation7 + $0xa8] sm:$0xff]
    %v443 = vld [vmem:[#allocation7 + $0xb0] sm:$0xff]
    %v444 = vld [vmem:[#allocation7 + $0xb8] sm:$0xff]
    %v445 = vld [vmem:[#allocation7 + $0xc0] sm:$0xff]
    %v446 = vld [vmem:[#allocation7 + $0xc8] sm:$0xff]
    %v447 = vld [vmem:[#allocation7 + $0xd0] sm:$0xff]
    %v448 = vld [vmem:[#allocation7 + $0xd8] sm:$0xff]
    %v449 = vld [vmem:[#allocation7 + $0xe0] sm:$0xff]
    %v450 = vld [vmem:[#allocation7 + $0xe8] sm:$0xff]
    %v451 = vld [vmem:[#allocation7 + $0xf0] sm:$0xff]
    %v452 = vld [vmem:[#allocation7 + $0xf8] sm:$0xff]
    %v453 = vld [vmem:[#allocation7 + $0x100] sm:$0xff]
    %v454 = vld [vmem:[#allocation7 + $0x108] sm:$0xff]
    %v455 = vld [vmem:[#allocation7 + $0x110] sm:$0xff]
    %v456 = vld [vmem:[#allocation7 + $0x118] sm:$0xff]
    %v457 = vld [vmem:[#allocation7 + $0x120] sm:$0xff]
    %v458 = vld [vmem:[#allocation7 + $0x128] sm:$0xff]
    %v459 = vld [vmem:[#allocation7 + $0x130] sm:$0xff]
    %v460 = vld [vmem:[#allocation7 + $0x138] sm:$0xff]
    %v461 = vld [vmem:[#allocation7 + $0x140] sm:$0xff]
    %v462 = vld [vmem:[#allocation7 + $0x148] sm:$0xff]
    %v463 = vld [vmem:[#allocation7 + $0x150] sm:$0xff]
    %v464 = vld [vmem:[#allocation7 + $0x158] sm:$0xff]
    %v465 = vld [vmem:[#allocation7 + $0x160] sm:$0xff]
    %v466 = vld [vmem:[#allocation7 + $0x168] sm:$0xff]
    %v467 = vld [vmem:[#allocation7 + $0x170] sm:$0xff]
    %v468 = vld [vmem:[#allocation7 + $0x178] sm:$0xff]
    %v469 = vld [vmem:[#allocation7 + $0x180] sm:$0xff]
    %v470 = vld [vmem:[#allocation7 + $0x188] sm:$0xff]
    %v471 = vld [vmem:[#allocation7 + $0x190] sm:$0xff]
    %v472 = vld [vmem:[#allocation7 + $0x198] sm:$0xff]
    %v473 = vld [vmem:[#allocation7 + $0x1a0] sm:$0xff]
    %v474 = vld [vmem:[#allocation7 + $0x1a8] sm:$0xff]
    %v475 = vld [vmem:[#allocation7 + $0x1b0] sm:$0xff]
    %v476 = vld [vmem:[#allocation7 + $0x1b8] sm:$0xff]
    %v477 = vld [vmem:[#allocation7 + $0x1c0] sm:$0xff]
    %v478 = vld [vmem:[#allocation7 + $0x1c8] sm:$0xff]
    %v479 = vld [vmem:[#allocation7 + $0x1d0] sm:$0xff]
    %v480 = vld [vmem:[#allocation7 + $0x1d8] sm:$0xff]
    %v481 = vld [vmem:[#allocation7 + $0x1e0] sm:$0xff]
    %v482 = vld [vmem:[#allocation7 + $0x1e8] sm:$0xff]
    %v483 = vld [vmem:[#allocation7 + $0x1f0] sm:$0xff]
    %v484 = vld [vmem:[#allocation7 + $0x1f8] sm:$0xff]
    %v485 = vld [vmem:[#allocation7 + $0x200] sm:$0xff]
    %v486 = vld [vmem:[#allocation7 + $0x208] sm:$0xff]
    %v487 = vld [vmem:[#allocation7 + $0x210] sm:$0xff]
    %v488 = vld [vmem:[#allocation7 + $0x218] sm:$0xff]
    %v489 = vld [vmem:[#allocation7 + $0x220] sm:$0xff]
    %v490 = vld [vmem:[#allocation7 + $0x228] sm:$0xff]
    %v491 = vld [vmem:[#allocation7 + $0x230] sm:$0xff]
    %v492 = vld [vmem:[#allocation7 + $0x238] sm:$0xff]
    %v493 = vld [vmem:[#allocation7 + $0x240] sm:$0xff]
    %v494 = vld [vmem:[#allocation7 + $0x248] sm:$0xff]
    %v495 = vld [vmem:[#allocation7 + $0x250] sm:$0xff]
    %v496 = vld [vmem:[#allocation7 + $0x258] sm:$0xff]
    %v497 = vld [vmem:[#allocation7 + $0x260] sm:$0xff]
    %v498 = vld [vmem:[#allocation7 + $0x268] sm:$0xff]
    %v499 = vld [vmem:[#allocation7 + $0x270] sm:$0xff]
    %v500 = vld [vmem:[#allocation7 + $0x278] sm:$0xff]
    %v501 = vld [vmem:[#allocation7 + $0x280] sm:$0xff]
    %v502 = vld [vmem:[#allocation7 + $0x288] sm:$0xff]
    %v503 = vld [vmem:[#allocation7 + $0x290] sm:$0xff]
    %v504 = vld [vmem:[#allocation7 + $0x298] sm:$0xff]
    %v505 = vld [vmem:[#allocation7 + $0x2a0] sm:$0xff]
    %v506 = vld [vmem:[#allocation7 + $0x2a8] sm:$0xff]
    %v507 = vld [vmem:[#allocation7 + $0x2b0] sm:$0xff]
    %v508 = vld [vmem:[#allocation7 + $0x2b8] sm:$0xff]
    %v509 = vld [vmem:[#allocation7 + $0x2c0] sm:$0xff]
    %v510 = vld [vmem:[#allocation7 + $0x2c8] sm:$0xff]
    %v511 = vld [vmem:[#allocation7 + $0x2d0] sm:$0xff]
    %v512 = vld [vmem:[#allocation7 + $0x2d8] sm:$0xff]
    %v513 = vld [vmem:[#allocation7 + $0x2e0] sm:$0xff]
    %v514 = vld [vmem:[#allocation7 + $0x2e8] sm:$0xff]
    %v515 = vld [vmem:[#allocation7 + $0x2f0] sm:$0xff]
    %v516 = vld [vmem:[#allocation7 + $0x2f8] sm:$0xff]
    %v517 = vld [vmem:[#allocation7 + $0x300] sm:$0xff]
    %v518 = vld [vmem:[#allocation7 + $0x308] sm:$0xff]
    %v519 = vld [vmem:[#allocation7 + $0x310] sm:$0xff]
    %v520 = vld [vmem:[#allocation7 + $0x318] sm:$0xff]
    %v521 = vld [vmem:[#allocation7 + $0x320] sm:$0xff]
    %v522 = vld [vmem:[#allocation7 + $0x328] sm:$0xff]
    %v523 = vld [vmem:[#allocation7 + $0x330] sm:$0xff]
    %v524 = vld [vmem:[#allocation7 + $0x338] sm:$0xff]
    %v525 = vld [vmem:[#allocation7 + $0x340] sm:$0xff]
    %v526 = vld [vmem:[#allocation7 + $0x348] sm:$0xff]
    %v527 = vld [vmem:[#allocation7 + $0x350] sm:$0xff]
    %v528 = vld [vmem:[#allocation7 + $0x358] sm:$0xff]
    %v529 = vld [vmem:[#allocation7 + $0x360] sm:$0xff]
    %v530 = vld [vmem:[#allocation7 + $0x368] sm:$0xff]
    %v531 = vld [vmem:[#allocation7 + $0x370] sm:$0xff]
    %v532 = vld [vmem:[#allocation7 + $0x378] sm:$0xff]
    %v533 = vld [vmem:[#allocation7 + $0x380] sm:$0xff]
    %v534 = vld [vmem:[#allocation7 + $0x388] sm:$0xff]
    %v535 = vld [vmem:[#allocation7 + $0x390] sm:$0xff]
    %v536 = vld [vmem:[#allocation7 + $0x398] sm:$0xff]
    %v537 = vld [vmem:[#allocation7 + $0x3a0] sm:$0xff]
    %v538 = vld [vmem:[#allocation7 + $0x3a8] sm:$0xff]
    %v539 = vld [vmem:[#allocation7 + $0x3b0] sm:$0xff]
    %v540 = vld [vmem:[#allocation7 + $0x3b8] sm:$0xff]
    %v541 = vld [vmem:[#allocation7 + $0x3c0] sm:$0xff]
    %v542 = vld [vmem:[#allocation7 + $0x3c8] sm:$0xff]
    %v543 = vld [vmem:[#allocation7 + $0x3d0] sm:$0xff]
    %v544 = vld [vmem:[#allocation7 + $0x3d8] sm:$0xff]
    %v545 = vld [vmem:[#allocation7 + $0x3e0] sm:$0xff]
    %v546 = vld [vmem:[#allocation7 + $0x3e8] sm:$0xff]
    %v547 = vld [vmem:[#allocation7 + $0x3f0] sm:$0xff]
    %v548 = vld [vmem:[#allocation7 + $0x3f8] sm:$0xff]
    %v549 = vld [vmem:[#allocation7 + $0x400] sm:$0xff]
    %v550 = vld [vmem:[#allocation7 + $0x408] sm:$0xff]
    %v551 = vld [vmem:[#allocation7 + $0x410] sm:$0xff]
    %v552 = vld [vmem:[#allocation7 + $0x418] sm:$0xff]
    %v553 = vld [vmem:[#allocation7 + $0x420] sm:$0xff]
    %v554 = vld [vmem:[#allocation7 + $0x428] sm:$0xff]
    %v555 = vld [vmem:[#allocation7 + $0x430] sm:$0xff]
    %v556 = vld [vmem:[#allocation7 + $0x438] sm:$0xff]
    %v557 = vld [vmem:[#allocation7 + $0x440] sm:$0xff]
    %v558 = vld [vmem:[#allocation7 + $0x448] sm:$0xff]
    %v559 = vld [vmem:[#allocation7 + $0x450] sm:$0xff]
    %v560 = vld [vmem:[#allocation7 + $0x458] sm:$0xff]
    %v561 = vld [vmem:[#allocation7 + $0x460] sm:$0xff]
    %v562 = vld [vmem:[#allocation7 + $0x468] sm:$0xff]
    %v563 = vld [vmem:[#allocation7 + $0x470] sm:$0xff]
    %v564 = vld [vmem:[#allocation7 + $0x478] sm:$0xff]
    %565 = vmatpush.msra.mxu0 %v436
    %566 = vmatpush.msra.mxu0 %v435
    %567 = vmatpush.msra.mxu0 %v434
    %568 = vmatpush.msra.mxu0 %v433
    %569 = vmatpush.msra.mxu0 %v432
    %570 = vmatpush.msra.mxu0 %v431
    %571 = vmatpush.msra.mxu0 %v430
    %572 = vmatpush.msra.mxu0 %v429
    %573 = vmatpush.msra.mxu0 %v428
    %574 = vmatpush.msra.mxu0 %v427
    %575 = vmatpush.msra.mxu0 %v426
    %576 = vmatpush.msra.mxu0 %v425
    %577 = vmatpush.msra.mxu0 %v424
    %578 = vmatpush.msra.mxu0 %v423
    %579 = vmatpush.msra.mxu0 %v422
    %580 = vmatpush.msra.mxu0 %v421
    %581 = vmatmul.f32.gmra.mxu0 %v412
    %v582 = vpop.f32.mrf.mxu0
    %v583 = vadd.f32 0.0, %v582
    %584 = vdwg.mxu0
    %585 = vmatpush.msra.mxu0 %v452
    %586 = vmatpush.msra.mxu0 %v451
    %587 = vmatpush.msra.mxu0 %v450
    %588 = vmatpush.msra.mxu0 %v449
    %589 = vmatpush.msra.mxu0 %v448
    %590 = vmatpush.msra.mxu0 %v447
    %591 = vmatpush.msra.mxu0 %v446
    %592 = vmatpush.msra.mxu0 %v445
    %593 = vmatpush.msra.mxu0 %v444
    %594 = vmatpush.msra.mxu0 %v443
    %595 = vmatpush.msra.mxu0 %v442
    %596 = vmatpush.msra.mxu0 %v441
    %597 = vmatpush.msra.mxu0 %v440
    %598 = vmatpush.msra.mxu0 %v439
    %599 = vmatpush.msra.mxu0 %v438
    %600 = vmatpush.msra.mxu0 %v437
    %601 = vmatmul.f32.gmra.mxu0 %v413
    %v602 = vpop.f32.mrf.mxu0
    %v603 = vadd.f32 %v583, %v602
    %604 = vdwg.mxu0
    %605 = vmatpush.msra.mxu0 %v468
    %606 = vmatpush.msra.mxu0 %v467
    %607 = vmatpush.msra.mxu0 %v466
    %608 = vmatpush.msra.mxu0 %v465
    %609 = vmatpush.msra.mxu0 %v464
    %610 = vmatpush.msra.mxu0 %v463
    %611 = vmatpush.msra.mxu0 %v462
    %612 = vmatpush.msra.mxu0 %v461
    %613 = vmatpush.msra.mxu0 %v460
    %614 = vmatpush.msra.mxu0 %v459
    %615 = vmatpush.msra.mxu0 %v458
    %616 = vmatpush.msra.mxu0 %v457
    %617 = vmatpush.msra.mxu0 %v456
    %618 = vmatpush.msra.mxu0 %v455
    %619 = vmatpush.msra.mxu0 %v454
    %620 = vmatpush.msra.mxu0 %v453
    %621 = vmatmul.f32.gmra.mxu0 %v414
    %v622 = vpop.f32.mrf.mxu0
    %v623 = vadd.f32 %v603, %v622
    %624 = vdwg.mxu0
    %625 = vmatpush.msra.mxu0 %v484
    %626 = vmatpush.msra.mxu0 %v483
    %627 = vmatpush.msra.mxu0 %v482
    %628 = vmatpush.msra.mxu0 %v481
    %629 = vmatpush.msra.mxu0 %v480
    %630 = vmatpush.msra.mxu0 %v479
    %631 = vmatpush.msra.mxu0 %v478
    %632 = vmatpush.msra.mxu0 %v477
    %633 = vmatpush.msra.mxu0 %v476
    %634 = vmatpush.msra.mxu0 %v475
    %635 = vmatpush.msra.mxu0 %v474
    %636 = vmatpush.msra.mxu0 %v473
    %637 = vmatpush.msra.mxu0 %v472
    %638 = vmatpush.msra.mxu0 %v471
    %639 = vmatpush.msra.mxu0 %v470
    %640 = vmatpush.msra.mxu0 %v469
    %641 = vmatmul.f32.gmra.mxu0 %v415
    %v642 = vpop.f32.mrf.mxu0
    %v643 = vadd.f32 %v623, %v642
    %644 = vdwg.mxu0
    %645 = vmatpush.msra.mxu0 %v500
    %646 = vmatpush.msra.mxu0 %v499
    %647 = vmatpush.msra.mxu0 %v498
    %648 = vmatpush.msra.mxu0 %v497
    %649 = vmatpush.msra.mxu0 %v496
    %650 = vmatpush.msra.mxu0 %v495
    %651 = vmatpush.msra.mxu0 %v494
    %652 = vmatpush.msra.mxu0 %v493
    %653 = vmatpush.msra.mxu0 %v492
    %654 = vmatpush.msra.mxu0 %v491
    %655 = vmatpush.msra.mxu0 %v490
    %656 = vmatpush.msra.mxu0 %v489
    %657 = vmatpush.msra.mxu0 %v488
    %658 = vmatpush.msra.mxu0 %v487
    %659 = vmatpush.msra.mxu0 %v486
    %660 = vmatpush.msra.mxu0 %v485
    %661 = vmatmul.f32.gmra.mxu0 %v416
    %v662 = vpop.f32.mrf.mxu0
    %v663 = vadd.f32 %v643, %v662
    %664 = vdwg.mxu0
    %665 = vmatpush.msra.mxu0 %v516
    %666 = vmatpush.msra.mxu0 %v515
    %667 = vmatpush.msra.mxu0 %v514
    %668 = vmatpush.msra.mxu0 %v513
    %669 = vmatpush.msra.mxu0 %v512
    %670 = vmatpush.msra.mxu0 %v511
    %671 = vmatpush.msra.mxu0 %v510
    %672 = vmatpush.msra.mxu0 %v509
    %673 = vmatpush.msra.mxu0 %v508
    %674 = vmatpush.msra.mxu0 %v507
    %675 = vmatpush.msra.mxu0 %v506
    %676 = vmatpush.msra.mxu0 %v505
    %677 = vmatpush.msra.mxu0 %v504
    %678 = vmatpush.msra.mxu0 %v503
    %679 = vmatpush.msra.mxu0 %v502
    %680 = vmatpush.msra.mxu0 %v501
    %681 = vmatmul.f32.gmra.mxu0 %v417
    %v682 = vpop.f32.mrf.mxu0
    %v683 = vadd.f32 %v663, %v682
    %684 = vdwg.mxu0
    %685 = vmatpush.msra.mxu0 %v532
    %686 = vmatpush.msra.mxu0 %v531
    %687 = vmatpush.msra.mxu0 %v530
    %688 = vmatpush.msra.mxu0 %v529
    %689 = vmatpush.msra.mxu0 %v528
    %690 = vmatpush.msra.mxu0 %v527
    %691 = vmatpush.msra.mxu0 %v526
    %692 = vmatpush.msra.mxu0 %v525
    %693 = vmatpush.msra.mxu0 %v524
    %694 = vmatpush.msra.mxu0 %v523
    %695 = vmatpush.msra.mxu0 %v522
    %696 = vmatpush.msra.mxu0 %v521
    %697 = vmatpush.msra.mxu0 %v520
    %698 = vmatpush.msra.mxu0 %v519
    %699 = vmatpush.msra.mxu0 %v518
    %700 = vmatpush.msra.mxu0 %v517
    %701 = vmatmul.f32.gmra.mxu0 %v418
    %v702 = vpop.f32.mrf.mxu0
    %v703 = vadd.f32 %v683, %v702
    %704 = vdwg.mxu0
    %705 = vmatpush.msra.mxu0 %v548
    %706 = vmatpush.msra.mxu0 %v547
    %707 = vmatpush.msra.mxu0 %v546
    %708 = vmatpush.msra.mxu0 %v545
    %709 = vmatpush.msra.mxu0 %v544
    %710 = vmatpush.msra.mxu0 %v543
    %711 = vmatpush.msra.mxu0 %v542
    %712 = vmatpush.msra.mxu0 %v541
    %713 = vmatpush.msra.mxu0 %v540
    %714 = vmatpush.msra.mxu0 %v539
    %715 = vmatpush.msra.mxu0 %v538
    %716 = vmatpush.msra.mxu0 %v537
    %717 = vmatpush.msra.mxu0 %v536
    %718 = vmatpush.msra.mxu0 %v535
    %719 = vmatpush.msra.mxu0 %v534
    %720 = vmatpush.msra.mxu0 %v533
    %721 = vmatmul.f32.gmra.mxu0 %v419
    %v722 = vpop.f32.mrf.mxu0
    %v723 = vadd.f32 %v703, %v722
    %724 = vdwg.mxu0
    %725 = vmatpush.msra.mxu0 %v564
    %726 = vmatpush.msra.mxu0 %v563
    %727 = vmatpush.msra.mxu0 %v562
    %728 = vmatpush.msra.mxu0 %v561
    %729 = vmatpush.msra.mxu0 %v560
    %730 = vmatpush.msra.mxu0 %v559
    %731 = vmatpush.msra.mxu0 %v558
    %732 = vmatpush.msra.mxu0 %v557
    %733 = vmatpush.msra.mxu0 %v556
    %734 = vmatpush.msra.mxu0 %v555
    %735 = vmatpush.msra.mxu0 %v554
    %736 = vmatpush.msra.mxu0 %v553
    %737 = vmatpush.msra.mxu0 %v552
    %738 = vmatpush.msra.mxu0 %v551
    %739 = vmatpush.msra.mxu0 %v550
    %740 = vmatpush.msra.mxu0 %v549
    %741 = vmatmul.f32.gmra.mxu0 %v420
    %v742 = vpop.f32.mrf.mxu0
    %v743 = vadd.f32 %v723, %v742
    %744 = vdwg.mxu0
    %745 = vst [vmem:[#allocation9] sm:$0xff] %v743
    // Predicated region
    $region30: #{gmodel_forward.1} parent=1 // pred_check
      _
    $region31: #{gmodel_forward.1} parent=1 // pred_check_branch
      %747 = sbr.rel (0) target = $region33
    $region32: #{gmodel_forward.1} parent=1 // pred_region
      %749 = vsyncadd [#allocation4], 0
      %s751 = sshll.u32 [#allocation9], 4
      %s752 = int_to_ptr.vmem [resolvable:$true] %s751
      %s753 = sshll.u32 %s4, 4
      %s754 = int_to_ptr.hbm [resolvable:$true] %s753
      %756 = dma.vmem_to_hbm [thread:$0]  %s752, 128, %s754, [#allocation4]
    $region33: #{gmodel_forward.1} parent=1 // pred_fallthru
      _
    // Predicated region
    $region34: #{gmodel_forward.1} parent=1 // pred_check
      _
    $region35: #{gmodel_forward.1} parent=1 // pred_check_branch
      %758 = sbr.rel (0) target = $region37
    $region36: #{gmodel_forward.1} parent=1 // pred_region
      %760 = dma.done [#allocation4], 128
    $region37: #{gmodel_forward.1} parent=1 // pred_fallthru
      _
    %761 = vsyncpa [#allocation3], 1
    %762 = vsyncpa [#allocation8], 1
    %763 = vsyncpa [#allocation4], 1
    %764 = vsyncpa [#allocation5], 1

</llo_original>
